<compile_context>
chip_gen: v7x
topology: tpu7x:2x2x1
jax: 0.10.0
libtpu: 0.0.40
codegen_flags: <defaults>
</compile_context>

<pallas_src>
import functools

import jax
import jax.numpy as jnp
from jax.experimental import pallas as pl
from jax.experimental.pallas import tpu as pltpu


# Scoped VMEM: above the 16/32 MiB defaults, below v7x's 64 MiB physical.
_VMEM_LIMIT = 48 * 1024 * 1024

# Preferred tile sizes (256-aligned for v6e/v7x MXU). _tile() falls back to the
# full dimension when it does not divide evenly (e.g. the demo shapes below).
_TM, _TN, _TK = 256, 256, 512       # projection / MLP tiles
_TQ, _TKV = 128, 128                # attention q / kv tiles


def _tile(dim, target):
    return target if dim % target == 0 else dim


def _cparams(*sem):
    return pltpu.CompilerParams(dimension_semantics=sem,
                                vmem_limit_bytes=_VMEM_LIMIT)


# ----------------------------------------------------------------------------
# RMSNorm (row-tiled; fp32 statistics, bf16 output for matmul operands)
# ----------------------------------------------------------------------------

def _rmsnorm_kernel(eps, x_ref, w_ref, o_ref):
    x = x_ref[...].astype(jnp.float32)
    var = jnp.mean(x * x, axis=-1, keepdims=True)
    o_ref[...] = ((x * jax.lax.rsqrt(var + eps)) *
                  w_ref[...].astype(jnp.float32)).astype(o_ref.dtype)


def rmsnorm(x, w, eps, out_dtype=jnp.bfloat16):
    m, h = x.shape
    tm = _tile(m, _TM)
    return pl.pallas_call(
        functools.partial(_rmsnorm_kernel, eps),
        out_shape=jax.ShapeDtypeStruct((m, h), out_dtype),
        grid=(m // tm,),
        in_specs=[pl.BlockSpec((tm, h), lambda i: (i, 0)),
                  pl.BlockSpec((1, h), lambda i: (0, 0))],
        out_specs=pl.BlockSpec((tm, h), lambda i: (i, 0)),
        compiler_params=_cparams("parallel"),
    )(x, w.reshape(1, -1))


# ----------------------------------------------------------------------------
# Tiled matmul (bf16 operands, fp32 VMEM accumulator), optional residual add
# ----------------------------------------------------------------------------

def _matmul_kernel(x_ref, w_ref, o_ref, acc_ref):
    @pl.when(pl.program_id(2) == 0)
    def _():
        acc_ref[...] = jnp.zeros_like(acc_ref)
    acc_ref[...] += jnp.dot(x_ref[...], w_ref[...],
                            preferred_element_type=jnp.float32)

    @pl.when(pl.program_id(2) == pl.num_programs(2) - 1)
    def _():
        o_ref[...] = acc_ref[...].astype(o_ref.dtype)


def _matmul_res_kernel(x_ref, w_ref, r_ref, o_ref, acc_ref):
    @pl.when(pl.program_id(2) == 0)
    def _():
        acc_ref[...] = jnp.zeros_like(acc_ref)
    acc_ref[...] += jnp.dot(x_ref[...], w_ref[...],
                            preferred_element_type=jnp.float32)

    @pl.when(pl.program_id(2) == pl.num_programs(2) - 1)
    def _():
        o_ref[...] = (acc_ref[...] +
                      r_ref[...].astype(jnp.float32)).astype(o_ref.dtype)


def matmul(x, w, residual=None, out_dtype=jnp.bfloat16):
    m, k = x.shape
    n = w.shape[1]
    tm, tn, tk = _tile(m, _TM), _tile(n, _TN), _tile(k, _TK)
    grid = (m // tm, n // tn, k // tk)
    x_spec = pl.BlockSpec((tm, tk), lambda i, j, l: (i, l))
    w_spec = pl.BlockSpec((tk, tn), lambda i, j, l: (l, j))
    o_spec = pl.BlockSpec((tm, tn), lambda i, j, l: (i, j))
    scratch = [pltpu.VMEM((tm, tn), jnp.float32)]
    cp = _cparams("parallel", "parallel", "arbitrary")
    if residual is None:
        return pl.pallas_call(
            _matmul_kernel,
            out_shape=jax.ShapeDtypeStruct((m, n), out_dtype),
            grid=grid, in_specs=[x_spec, w_spec], out_specs=o_spec,
            scratch_shapes=scratch, compiler_params=cp,
        )(x, w)
    r_spec = pl.BlockSpec((tm, tn), lambda i, j, l: (i, j))
    return pl.pallas_call(
        _matmul_res_kernel,
        out_shape=jax.ShapeDtypeStruct((m, n), out_dtype),
        grid=grid, in_specs=[x_spec, w_spec, r_spec], out_specs=o_spec,
        scratch_shapes=scratch, compiler_params=cp,
    )(x, w, residual)


# ----------------------------------------------------------------------------
# Fused MLP up_proj + gate_proj + SiLU (shares the input tile DMA)
# ----------------------------------------------------------------------------

def _upgate_kernel(x_ref, wu_ref, wg_ref, o_ref, u_acc, g_acc):
    @pl.when(pl.program_id(2) == 0)
    def _():
        u_acc[...] = jnp.zeros_like(u_acc)
        g_acc[...] = jnp.zeros_like(g_acc)
    x = x_ref[...]
    u_acc[...] += jnp.dot(x, wu_ref[...], preferred_element_type=jnp.float32)
    g_acc[...] += jnp.dot(x, wg_ref[...], preferred_element_type=jnp.float32)

    @pl.when(pl.program_id(2) == pl.num_programs(2) - 1)
    def _():
        u = u_acc[...]
        # YuanMLP: down( gate(x) * silu(up(x)) )  -- SiLU on the *up* branch.
        o_ref[...] = (u * jax.nn.sigmoid(u) * g_acc[...]).astype(o_ref.dtype)


def mlp_up_gate(x, wu, wg):
    m, k = x.shape
    n = wu.shape[1]
    tm, tn, tk = _tile(m, _TM), _tile(n, _TN), _tile(k, _TK)
    return pl.pallas_call(
        _upgate_kernel,
        out_shape=jax.ShapeDtypeStruct((m, n), jnp.bfloat16),
        grid=(m // tm, n // tn, k // tk),
        in_specs=[pl.BlockSpec((tm, tk), lambda i, j, l: (i, l)),
                  pl.BlockSpec((tk, tn), lambda i, j, l: (l, j)),
                  pl.BlockSpec((tk, tn), lambda i, j, l: (l, j))],
        out_specs=pl.BlockSpec((tm, tn), lambda i, j, l: (i, j)),
        scratch_shapes=[pltpu.VMEM((tm, tn), jnp.float32),
                        pltpu.VMEM((tm, tn), jnp.float32)],
        compiler_params=_cparams("parallel", "parallel", "arbitrary"),
    )(x, wu, wg)


# ----------------------------------------------------------------------------
# LocalizedFiltering (lf_gate): conv1 + conv2 + residual + RMSNorm, fused,
# gridded over batch.  Prompt path => zero lf1/lf2 caches => the previous
# timestep of row 0 is zero; the time shift is built in-kernel (no jnp.pad).
# ----------------------------------------------------------------------------

def _lf_gate_kernel(eps, x_ref, w10_ref, w11_ref, b1_ref,
                    w20_ref, w21_ref, b2_ref, g_ref, o_ref):
    x = x_ref[0]                                            # (L, H) bf16
    zero_row = jnp.zeros((1, x.shape[1]), x.dtype)
    x_prev = jnp.concatenate([zero_row, x[:-1, :]], axis=0)  # x[t-1], 0 at t=0

    # conv1: out1[t] = W1_tap0 @ x[t-1] + W1_tap1 @ x[t] + b1
    o1 = (jnp.dot(x, w11_ref[...], preferred_element_type=jnp.float32)
          + jnp.dot(x_prev, w10_ref[...], preferred_element_type=jnp.float32)
          + b1_ref[...])
    o1 = o1.astype(jnp.bfloat16)                            # (L, H/2)
    zero_row1 = jnp.zeros((1, o1.shape[1]), o1.dtype)
    o1_prev = jnp.concatenate([zero_row1, o1[:-1, :]], axis=0)

    # conv2: out2[t] = W2_tap0 @ o1[t-1] + W2_tap1 @ o1[t] + b2
    o2 = (jnp.dot(o1, w21_ref[...], preferred_element_type=jnp.float32)
          + jnp.dot(o1_prev, w20_ref[...], preferred_element_type=jnp.float32)
          + b2_ref[...])

    o3 = o2 + x.astype(jnp.float32)                         # LF residual
    var = jnp.mean(o3 * o3, axis=-1, keepdims=True)         # output_layernorm
    o_ref[0] = ((o3 * jax.lax.rsqrt(var + eps)) *
                g_ref[...].astype(jnp.float32)).astype(o_ref.dtype)


def lf_gate(x, p, eps=1e-6):
    # LocalizedFiltering.output_layernorm is LlamaRMSNorm with default eps=1e-6
    # (independent of the layer's rms_norm_eps), per the reference module.
    B, L, H = x.shape
    Hh = H // 2
    # TODO(synk): for production H (>= 4096) the conv weights should be
    # K-tiled and the time axis tiled with an overlapping row; the demo keeps
    # full blocks per batch element.
    return pl.pallas_call(
        functools.partial(_lf_gate_kernel, eps),
        out_shape=jax.ShapeDtypeStruct((B, L, H), jnp.bfloat16),
        grid=(B,),
        in_specs=[pl.BlockSpec((1, L, H), lambda b: (b, 0, 0)),
                  pl.BlockSpec((H, Hh), lambda b: (0, 0)),
                  pl.BlockSpec((H, Hh), lambda b: (0, 0)),
                  pl.BlockSpec((1, Hh), lambda b: (0, 0)),
                  pl.BlockSpec((Hh, H), lambda b: (0, 0)),
                  pl.BlockSpec((Hh, H), lambda b: (0, 0)),
                  pl.BlockSpec((1, H), lambda b: (0, 0)),
                  pl.BlockSpec((1, H), lambda b: (0, 0))],
        out_specs=pl.BlockSpec((1, L, H), lambda b: (b, 0, 0)),
        compiler_params=_cparams("parallel"),
    )(x, p["conv1_w0"], p["conv1_w1"], p["conv1_b"],
      p["conv2_w0"], p["conv2_w1"], p["conv2_b"],
      p["lf_ln_w"].reshape(1, -1))


# ----------------------------------------------------------------------------
# Flash-style causal attention with fused rotary embedding.
# Grid (B, NH, q_tiles, kv_tiles); running max/sum/acc in VMEM scratch;
# causal tile skipping; finite masking value (no NaN on fully-masked rows).
# ----------------------------------------------------------------------------

def _flash_attn_kernel(scale, q_ref, k_ref, v_ref, cq_ref, sq_ref,
                       ck_ref, sk_ref, o_ref, m_sc, l_sc, acc_sc):
    i = pl.program_id(2)
    j = pl.program_id(3)
    tq = q_ref.shape[2]
    tk = k_ref.shape[2]
    half = q_ref.shape[3] // 2

    @pl.when(j == 0)
    def _():
        m_sc[...] = jnp.full_like(m_sc, -1e30)
        l_sc[...] = jnp.zeros_like(l_sc)
        acc_sc[...] = jnp.zeros_like(acc_sc)

    # Skip KV tiles entirely in the future of this q tile (causal).
    @pl.when(j * tk <= (i + 1) * tq - 1)
    def _():
        q = q_ref[0, 0].astype(jnp.float32)                  # (tq, D)
        k = k_ref[0, 0].astype(jnp.float32)                  # (tk, D)
        # RoPE: x*cos + rotate_half(x)*sin, rotate_half = concat(-x2, x1).
        q_rot = jnp.concatenate([-q[:, half:], q[:, :half]], axis=1)
        k_rot = jnp.concatenate([-k[:, half:], k[:, :half]], axis=1)
        qr = (q * cq_ref[0] + q_rot * sq_ref[0]).astype(jnp.bfloat16)
        kr = (k * ck_ref[0] + k_rot * sk_ref[0]).astype(jnp.bfloat16)

        s = jax.lax.dot_general(qr, kr, (((1,), (1,)), ((), ())),
                                preferred_element_type=jnp.float32) * scale
        qpos = i * tq + jax.lax.broadcasted_iota(jnp.int32, (tq, tk), 0)
        kpos = j * tk + jax.lax.broadcasted_iota(jnp.int32, (tq, tk), 1)
        s = jnp.where(kpos <= qpos, s, -1e30)                # causal mask

        m_prev = m_sc[...]
        m_new = jnp.maximum(m_prev, jnp.max(s, axis=-1, keepdims=True))
        alpha = jnp.exp(m_prev - m_new)
        p = jnp.exp(s - m_new)
        l_sc[...] = alpha * l_sc[...] + jnp.sum(p, axis=-1, keepdims=True)
        acc_sc[...] = alpha * acc_sc[...] + jnp.dot(
            p.astype(jnp.bfloat16), v_ref[0, 0],
            preferred_element_type=jnp.float32)
        m_sc[...] = m_new

    @pl.when(j == pl.num_programs(3) - 1)
    def _():
        # Division is on a (tq, 1) vector only (negligible cost).
        o_ref[0, 0] = (acc_sc[...] / l_sc[...]).astype(o_ref.dtype)


def flash_attention(q, k, v, cos, sin, scale):
    B, NH, L, D = q.shape
    tq = _tile(L, _TQ)
    tk = _tile(L, _TKV)
    q_spec = pl.BlockSpec((1, 1, tq, D), lambda b, h, i, j: (b, h, i, 0))
    k_spec = pl.BlockSpec((1, 1, tk, D), lambda b, h, i, j: (b, h, j, 0))
    cq_spec = pl.BlockSpec((1, tq, D), lambda b, h, i, j: (b, i, 0))
    ck_spec = pl.BlockSpec((1, tk, D), lambda b, h, i, j: (b, j, 0))
    return pl.pallas_call(
        functools.partial(_flash_attn_kernel, scale),
        out_shape=jax.ShapeDtypeStruct((B, NH, L, D), jnp.bfloat16),
        grid=(B, NH, L // tq, L // tk),
        in_specs=[q_spec, k_spec, k_spec, cq_spec, cq_spec, ck_spec, ck_spec],
        out_specs=pl.BlockSpec((1, 1, tq, D), lambda b, h, i, j: (b, h, i, 0)),
        scratch_shapes=[pltpu.VMEM((tq, 1), jnp.float32),
                        pltpu.VMEM((tq, 1), jnp.float32),
                        pltpu.VMEM((tq, D), jnp.float32)],
        compiler_params=_cparams("parallel", "parallel", "parallel",
                                 "arbitrary"),
    )(q, k, v, cos, sin, cos, sin)


# ----------------------------------------------------------------------------
# YuanDecoderLayer forward (prompt path, tp_size = 1)
# ----------------------------------------------------------------------------

def yuan_decoder_layer(positions, hidden_states, p, *,
                       rope_base=10000.0, rms_eps=1e-6):
    B, L, H = hidden_states.shape
    NH = p["num_heads"]
    D = H // NH
    x_flat = hidden_states.reshape(B * L, H)                 # fp32 residual

    # --- input_layernorm ---
    h_ln = rmsnorm(x_flat, p["input_ln_w"], rms_eps)         # (B*L, H) bf16

    # --- v projection (consumes the pre-LF normalized hidden states) ---
    v = matmul(h_ln, p["v_w"])                               # (B*L, H) bf16

    # --- LocalizedFiltering (fused conv1+conv2+residual+RMSNorm) ---
    lf_out = lf_gate(h_ln.reshape(B, L, H), p)               # (B, L, H) bf16

    # --- qk projection + per-head split ---
    qk = matmul(lf_out.reshape(B * L, H), p["qk_w"])         # (B*L, 2H) bf16
    qk = qk.reshape(B, L, NH, 2 * D)
    q = qk[..., :D].transpose(0, 2, 1, 3)                    # (B, NH, L, D)
    k = qk[..., D:].transpose(0, 2, 1, 3)
    v4 = v.reshape(B, L, NH, D).transpose(0, 2, 1, 3)
    # TODO(synk): these layout-only transposes could be folded into attention
    # BlockSpecs at production head dims (D a multiple of 128).

    # --- rotary tables (YuanRotaryEmbedding, base=10000), fp32, computed once
    #     per forward in XLA (would be hoisted across layers in a full model) --
    inv_freq = 1.0 / (rope_base **
                      (jnp.arange(0, D, 2, dtype=jnp.float32) / D))   # (D/2,)
    freqs = positions.astype(jnp.float32)[..., None] * inv_freq       # (B,L,D/2)
    emb = jnp.concatenate([freqs, freqs], axis=-1)                    # (B,L,D)
    cos = jnp.cos(emb)
    sin = jnp.sin(emb)

    # --- flash-style causal attention with fused RoPE ---
    attn = flash_attention(q, k, v4, cos, sin, scale=float(D) ** -0.5)
    attn = attn.transpose(0, 2, 1, 3).reshape(B * L, NH * D)          # bf16

    # --- o_proj + residual add (fp32) ---
    h = matmul(attn, p["o_w"], residual=x_flat, out_dtype=jnp.float32)

    # --- post_attention_layernorm + MLP (up/gate fused) + residual ---
    h_ln2 = rmsnorm(h, p["post_ln_w"], rms_eps)                        # bf16
    mid = mlp_up_gate(h_ln2, p["up_w"], p["gate_w"])                   # bf16
    out = matmul(mid, p["down_w"], residual=h, out_dtype=jnp.float32)
    return out.reshape(B, L, H)


if __name__ == "__main__":
    B, L, H, NH, I = 2, 8, 32, 4, 64
    D = H // NH

    key = jax.random.PRNGKey(0)
    ks = jax.random.split(key, 16)

    def w(k, shape, dtype=jnp.bfloat16):
        return (0.02 * jax.random.normal(k, shape, jnp.float32)).astype(dtype)

    params = dict(
        num_heads=NH,
        input_ln_w=jnp.ones((H,), jnp.float32),
        post_ln_w=jnp.ones((H,), jnp.float32),
        lf_ln_w=jnp.ones((H,), jnp.float32),
        v_w=w(ks[0], (H, H)),              # stored as [in, out], bf16
        qk_w=w(ks[1], (H, 2 * H)),
        o_w=w(ks[2], (H, H)),
        conv1_w0=w(ks[3], (H, H // 2)),    # conv1 tap 0 (previous timestep)
        conv1_w1=w(ks[4], (H, H // 2)),    # conv1 tap 1 (current timestep)
        conv1_b=w(ks[5], (1, H // 2), jnp.float32),
        conv2_w0=w(ks[6], (H // 2, H)),
        conv2_w1=w(ks[7], (H // 2, H)),
        conv2_b=w(ks[8], (1, H), jnp.float32),
        up_w=w(ks[9], (H, I)),
        gate_w=w(ks[10], (H, I)),
        down_w=w(ks[11], (I, H)),
    )

    x = jax.random.normal(ks[12], (B, L, H), jnp.float32)
    positions = jnp.broadcast_to(
        jnp.arange(L, dtype=jnp.int32)[None, :], (B, L))

    out = yuan_decoder_layer(positions, x, params)
    jax.block_until_ready(out)
    assert out.shape == (B, L, H)
    assert bool(jnp.all(jnp.isfinite(out)))
    print("KERNEL_OK")
</pallas_src>

<mosaic_0001>
module attributes {stable_mosaic.version = 11 : i64} {
  func.func @_rmsnorm_kernel(%arg0: i32, %arg1: memref<16x32xf32, #tpu.memory_space<vmem>>, %arg2: memref<1x32xf32, #tpu.memory_space<vmem>>, %arg3: memref<16x32xbf16, #tpu.memory_space<vmem>>) attributes {dimension_semantics = [#tpu.dimension_semantics<parallel>], iteration_bounds = array<i64: 1>, scalar_prefetch = 0 : i64, scratch_operands = 0 : i64, tpu.core_type = #tpu.core_type<tc>, window_params = [{transform_indices = @transform_0, window_bounds = array<i64: 16, 32>}, {pipeline_mode = #tpu.pipeline_mode<synchronous>, transform_indices = @transform_1, window_bounds = array<i64: 1, 32>}, {transform_indices = @transform_2, window_bounds = array<i64: 16, 32>}]} {
    %c0 = arith.constant 0 : index
    %c0_0 = arith.constant 0 : index
    %0 = vector.load %arg1[%c0, %c0_0] : memref<16x32xf32, #tpu.memory_space<vmem>>, vector<16x32xf32>
    %1 = arith.mulf %0, %0 : vector<16x32xf32>
    %cst = arith.constant dense<0.000000e+00> : vector<16xf32>
    %2 = vector.multi_reduction <add>, %1, %cst [1] : vector<16x32xf32> to vector<16xf32>
    %3 = vector.shape_cast %2 : vector<16xf32> to vector<16x1xf32>
    %cst_1 = arith.constant 3.200000e+01 : f32
    %4 = vector.broadcast %cst_1 : f32 to vector<16x1xf32>
    %5 = arith.divf %3, %4 : vector<16x1xf32>
    %cst_2 = arith.constant 9.99999997E-7 : f32
    %6 = vector.broadcast %cst_2 : f32 to vector<16x1xf32>
    %7 = arith.addf %5, %6 : vector<16x1xf32>
    %8 = math.rsqrt %7 : vector<16x1xf32>
    %9 = vector.broadcast %8 : vector<16x1xf32> to vector<16x32xf32>
    %10 = arith.mulf %0, %9 : vector<16x32xf32>
    %c0_3 = arith.constant 0 : index
    %c0_4 = arith.constant 0 : index
    %11 = vector.load %arg2[%c0_3, %c0_4] : memref<1x32xf32, #tpu.memory_space<vmem>>, vector<1x32xf32>
    %12 = vector.broadcast %11 : vector<1x32xf32> to vector<16x32xf32>
    %13 = arith.mulf %10, %12 : vector<16x32xf32>
    %14 = arith.truncf %13 : vector<16x32xf32> to vector<16x32xbf16>
    %c0_5 = arith.constant 0 : index
    %c0_6 = arith.constant 0 : index
    %15 = vector.load %arg3[%c0_5, %c0_6] : memref<16x32xbf16, #tpu.memory_space<vmem>>, vector<16x32xbf16>
    tpu.vector_store %arg3[%c0_5, %c0_6], %14 {strides = array<i32>} : memref<16x32xbf16, #tpu.memory_space<vmem>>, vector<16x32xbf16>,
    return
  }
  func.func @transform_0(%arg0: i32) -> (i32, i32) {
    %c0_i32 = arith.constant 0 : i32
    %c0_i32_0 = arith.constant 0 : i32
    return %arg0, %c0_i32 : i32, i32
  }
  func.func @transform_1(%arg0: i32) -> (i32, i32) {
    %c0_i32 = arith.constant 0 : i32
    %c0_i32_0 = arith.constant 0 : i32
    %c0_i32_1 = arith.constant 0 : i32
    return %c0_i32, %c0_i32_0 : i32, i32
  }
  func.func @transform_2(%arg0: i32) -> (i32, i32) {
    %c0_i32 = arith.constant 0 : i32
    %c0_i32_0 = arith.constant 0 : i32
    return %arg0, %c0_i32 : i32, i32
  }
}

</mosaic_0001>

<llo_original>
// kernel: tpu_custom_call.1
$region0: #{tpu_custom_call.1}
  #allocation0 [shape = 'u32[]', space=smem, size = 0x4, offset = 0x4, fixed_abs, tag = 'smem constant byte address 0x4 - core index']
  #allocation1 [shape = 'u32[144,128]{1,0:T(1,128)}', space=vmem, size = 0x12000, scoped, tag = 'internal scratch']
  %s0 = inlined_call_operand.hbm [shape: f32[16,32], index: 0, kind: input, shape index: {}]
  %s1 = inlined_call_operand.vmem [shape: f32[1,32], index: 1, kind: input, shape index: {}]
  %s2 = inlined_call_operand.hbm [shape: bf16[16,32], index: 2, kind: output, shape index: {}]
  %s3 = sld [smem:[#allocation0]]
  $region22: #{tpu_custom_call.1} parent=0
    _
  %s5 = ssub.s32 1, %s3
  %s6 = scalar_select 0, %s5, %s3
  $region1: #{tpu_custom_call.1} parent=0
    #allocation2 [shape = 'u8[8192]{0}', space=vmem, size = 0x2000, scoped, tag = 'input window, operand 0, single buffered']
    #allocation3 [shape = 's32[1]{0}', space=sflag, size = 0x4, scoped, tag = 'scoped memory for tpu_custom_call.1']
    #allocation4 [shape = 's32[1]{0}', space=sflag, size = 0x4, scoped, tag = 'scoped memory for tpu_custom_call.1']
    #allocation5 [shape = 'u8[4096]{0}', space=vmem, size = 0x1000, scoped, tag = 'output window, operand 0, single buffered']
    %7 = vsyncpa [#allocation3], 0
    %8 = vsyncpa [#allocation4], 0
    // Predicated region
    $region2: #{tpu_custom_call.1} parent=1 // pred_check
      _
    $region3: #{tpu_custom_call.1} parent=1 // pred_check_branch
      %10 = sbr.rel (0) target = $region5
    $region4: #{tpu_custom_call.1} parent=1 // pred_region
      %s12 = ssub.s32 256, 256
      %13 = vsyncadd [#allocation3], %s12
      %s14 = sshll.u32 [#allocation2], 4
      %s15 = int_to_ptr.vmem [resolvable:$true] %s14
      %20 = dma.hbm_to_vmem [thread:$0]  %s0, 256, %s15, [#allocation3], 128, 128, 8
    $region5: #{tpu_custom_call.1} parent=1 // pred_fallthru
      _
    // Predicated region
    $region6: #{tpu_custom_call.1} parent=1 // pred_check
      _
    $region7: #{tpu_custom_call.1} parent=1 // pred_check_branch
      %22 = sbr.rel (0) target = $region9
    $region8: #{tpu_custom_call.1} parent=1 // pred_region
      _
    $region9: #{tpu_custom_call.1} parent=1 // pred_fallthru
      _
    // Predicated region
    $region10: #{tpu_custom_call.1} parent=1 // pred_check
      _
    $region11: #{tpu_custom_call.1} parent=1 // pred_check_branch
      %24 = sbr.rel (0) target = $region13
    $region12: #{tpu_custom_call.1} parent=1 // pred_region
      %25 = dma.done [#allocation3], 256
    $region13: #{tpu_custom_call.1} parent=1 // pred_fallthru
      _
    %v26 = vld [vmem:[#allocation2] sm:$0xff]
    %v27 = vld [vmem:[#allocation2 + $0x8] sm:$0xff]
    %v28 = vmul.f32 %v26, %v26
    %v29 = vmul.f32 %v27, %v27
    %vm30 = vcmask 261120
    %v31 = vsel %vm30, %v28, 0.0
    %32 = vadd.xlane.f32.xlu0 %v31
    %v33 = vpop.xlane.xlu0 %32
    %v34 = vsel %vm30, %v29, 0.0
    %35 = vadd.xlane.f32.xlu0 %v34
    %v36 = vpop.xlane.xlu0 %35
    %v37 = vrcp.pop 32.0
    %v38 = vmul.f32 %v33, %v37
    %v39 = vmul.f32 %v36, %v37
    %v40 = vadd.f32 %v38, 1e-06
    %v41 = vadd.f32 %v39, 1e-06
    %v42 = vrsqrt.pop %v40
    %v43 = vrsqrt.pop %v41
    %v44 = vmul.f32 %v26, %v42
    %v45 = vmul.f32 %v27, %v43
    %v46 = vld [vmem:[%s1] sm:$0x1]
    %v48 = vlaneseq
    %v49 = vshrl.u32 %v48, 7
    %v50 = vsub.s32 0, %v49
    %v51 = vrot.slane %v46, %v50
    %v53 = vmul.f32 %v44, %v51
    %v54 = vmul.f32 %v45, %v51
    %v55 = vpack.c.bf16 %v54, %v53
    %v57 = vunpack.c.l.b16 %v55
    %v58 = vunpack.c.h.b16 %v55
    %v59 = vpack.c.b16 %v57, %v57
    %v60 = vpack.c.b16 %v58, %v58
    %vm63 = vcmask 257024
    %64 = vst.msk [vmem:[#allocation5] sm:$0xf] %vm63, %v59
    %65 = vst.msk [vmem:[#allocation5 + $0x4] sm:$0xf] %vm63, %v60
    // Predicated region
    $region14: #{tpu_custom_call.1} parent=1 // pred_check
      _
    $region15: #{tpu_custom_call.1} parent=1 // pred_check_branch
      %67 = sbr.rel (0) target = $region17
    $region16: #{tpu_custom_call.1} parent=1 // pred_region
      %s69 = ssub.s32 128, 128
      %70 = vsyncadd [#allocation4], %s69
      %s71 = sshll.u32 [#allocation5], 4
      %s72 = int_to_ptr.vmem [resolvable:$true] %s71
      %77 = dma.vmem_to_hbm [thread:$0]  %s72, 128, %s2, [#allocation4], 64, 64, 4
    $region17: #{tpu_custom_call.1} parent=1 // pred_fallthru
      _
    // Predicated region
    $region18: #{tpu_custom_call.1} parent=1 // pred_check
      _
    $region19: #{tpu_custom_call.1} parent=1 // pred_check_branch
      %79 = sbr.rel (0) target = $region21
    $region20: #{tpu_custom_call.1} parent=1 // pred_region
      %80 = dma.done [#allocation4], 128
    $region21: #{tpu_custom_call.1} parent=1 // pred_fallthru
      _
    %81 = vsyncpa [#allocation3], 1
    %82 = vsyncpa [#allocation4], 1

</llo_original>
